<compile_context>
chip_gen: v7x
topology: tpu7x:2x2x1
jax: 0.10.0
libtpu: 0.0.40
codegen_flags: <defaults>
</compile_context>

<pallas_src>
import functools

import jax
import jax.numpy as jnp
from jax.experimental import pallas as pl
from jax.experimental.pallas import tpu as pltpu


def _vmem_limit_bytes():
    """Generation-aware scoped-VMEM limit: ~3/4 of physical VMEM
    (v7x: 64 MiB -> 48 MiB; v5e/v6e: 128 MiB -> 96 MiB), safe fallback."""
    phys = 64 << 20
    try:
        phys = int(pltpu.get_tpu_info().vmem_capacity_bytes)
    except Exception:
        pass
    return max(32 << 20, min(96 << 20, (phys * 3) // 4))


def _pick_batch_tile(B, C, itemsize):
    """Row-tile size: a multiple of the dtype's sublane granularity, sized so
    one f32 compute block is <= ~4 MiB (2 inputs x 2 pipeline buffers plus
    ~3-4 live f32 intermediates stays well under v7x's 64 MiB VMEM), and
    shrunk if needed so the grid has >= 2 blocks for v7x's two TensorCores."""
    row_gran = max(8, 32 // itemsize)          # 8 for f32, 16 for bf16
    budget_f32 = 4 << 20                       # f32 compute bytes per block
    rows_by_budget = (budget_f32 // (C * 4)) // row_gran * row_gran
    tb = max(row_gran, rows_by_budget)

    b_min_pad = -(-B // row_gran) * row_gran   # B padded to row granularity
    tb = min(tb, b_min_pad)

    # Keep >= 2 grid blocks when the batch allows (megacore on v7x).
    if b_min_pad // tb < 2 and b_min_pad >= 2 * row_gran:
        tb = max(row_gran, (b_min_pad // 2) // row_gran * row_gran)
    return tb


def _distill_kl_kernel(ys_ref, yt_ref, out_ref, *, inv_T):
    # Per-batch-tile partial KL sum; T^2/B scaling is applied in the wrapper.
    s = ys_ref[...].astype(jnp.float32) * inv_T   # multiply by 1/T, not divide
    t = yt_ref[...].astype(jnp.float32) * inv_T

    s_sh = s - jnp.max(s, axis=-1, keepdims=True)
    t_sh = t - jnp.max(t, axis=-1, keepdims=True)

    sum_s = jnp.sum(jnp.exp(s_sh), axis=-1, keepdims=True)        # (tb, 1)
    e_t = jnp.exp(t_sh)
    sum_t = jnp.sum(e_t, axis=-1, keepdims=True)                  # (tb, 1)
    cross = jnp.sum(e_t * (t_sh - s_sh), axis=-1, keepdims=True)  # (tb, 1)

    # Exact per-row KL (sum(p_t) == 1): cross/sum_t + log(sum_s) - log(sum_t).
    kl_rows = cross / sum_t + jnp.log(sum_s) - jnp.log(sum_t)
    out_ref[0, 0] = jnp.sum(kl_rows)


def distill_kl(y_s, y_t, T: float):
    """KL-distillation loss: KL(softmax(y_t/T) || softmax(y_s/T)) * T^2 / B."""
    B, C = y_s.shape
    assert y_t.shape == (B, C)
    T_f = float(T)
    itemsize = jnp.dtype(y_s.dtype).itemsize
    tb = _pick_batch_tile(B, C, itemsize)

    # Pad the batch to a tile multiple with zero rows; identical (zero) student
    # and teacher rows contribute exactly 0 to the KL sum.
    B_pad = -(-B // tb) * tb
    if B_pad != B:
        pad = ((0, B_pad - B), (0, 0))
        y_s = jnp.pad(y_s, pad)
        y_t = jnp.pad(y_t, pad)
    num_blocks = B_pad // tb

    # TODO(synk): for vocab-scale C (one row tile would blow VMEM) the class
    # axis would need an online-softmax grid axis instead of full rows.
    kernel = functools.partial(_distill_kl_kernel, inv_T=1.0 / T_f)
    cost = pl.CostEstimate(
        flops=10 * B_pad * C,
        transcendentals=2 * B_pad * C,
        bytes_accessed=2 * B_pad * C * itemsize + num_blocks * 4,
    )
    partials = pl.pallas_call(
        kernel,
        out_shape=jax.ShapeDtypeStruct((num_blocks, 1), jnp.float32),
        grid=(num_blocks,),
        in_specs=[
            pl.BlockSpec((tb, C), lambda i: (i, 0)),
            pl.BlockSpec((tb, C), lambda i: (i, 0)),
        ],
        out_specs=pl.BlockSpec(
            (1, 1), lambda i: (i, 0), memory_space=pltpu.MemorySpace.SMEM
        ),
        compiler_params=pltpu.CompilerParams(
            dimension_semantics=("parallel",),
            vmem_limit_bytes=_vmem_limit_bytes(),
        ),
        cost_estimate=cost,
    )(y_s, y_t)
    # Divide by the ORIGINAL batch size (padded rows contribute 0).
    return jnp.sum(partials) * jnp.float32(T_f * T_f / B)


def distill_kl_ref(y_s, y_t, T: float):
    """Pure-JAX reference for correctness check."""
    log_p_s = jax.nn.log_softmax(y_s.astype(jnp.float32) / T, axis=1)
    log_p_t = jax.nn.log_softmax(y_t.astype(jnp.float32) / T, axis=1)
    p_t = jnp.exp(log_p_t)
    return jnp.sum(p_t * (log_p_t - log_p_s)) * (T ** 2) / y_s.shape[0]


if __name__ == "__main__":
    key = jax.random.PRNGKey(0)
    T = 4.0  # distillation temperature

    # 1) Small f32 case: batch=8, classes=32 (single block).
    k1, k2, k3, k4 = jax.random.split(key, 4)
    y_s = jax.random.normal(k1, (8, 32), dtype=jnp.float32)
    y_t = jax.random.normal(k2, (8, 32), dtype=jnp.float32)
    loss = jax.block_until_ready(distill_kl(y_s, y_t, T))
    ref = jax.block_until_ready(distill_kl_ref(y_s, y_t, T))
    assert jnp.allclose(loss, ref, rtol=1e-4, atol=1e-6), (loss, ref)

    # 2) bf16, non-dividing batch: exercises zero-row padding, multi-block
    #    grid and the 16-row bf16 tile granularity.
    y_s2 = jax.random.normal(k3, (200, 384), dtype=jnp.bfloat16)
    y_t2 = jax.random.normal(k4, (200, 384), dtype=jnp.bfloat16)
    loss2 = jax.block_until_ready(distill_kl(y_s2, y_t2, T))
    ref2 = jax.block_until_ready(distill_kl_ref(y_s2, y_t2, T))
    assert jnp.allclose(loss2, ref2, rtol=1e-3, atol=1e-5), (loss2, ref2)

    print("KERNEL_OK")
</pallas_src>

<mosaic_0001>
module attributes {stable_mosaic.version = 11 : i64} {
  func.func @_distill_kl_kernel(%arg0: i32, %arg1: memref<8x32xf32, #tpu.memory_space<vmem>>, %arg2: memref<8x32xf32, #tpu.memory_space<vmem>>, %arg3: memref<1x1xf32, #tpu.memory_space<smem>>) attributes {dimension_semantics = [#tpu.dimension_semantics<parallel>], iteration_bounds = array<i64: 1>, scalar_prefetch = 0 : i64, scratch_operands = 0 : i64, tpu.core_type = #tpu.core_type<tc>, window_params = [{transform_indices = @transform_0, window_bounds = array<i64: 8, 32>}, {transform_indices = @transform_1, window_bounds = array<i64: 8, 32>}, {transform_indices = @transform_2, window_bounds = array<i64: 1, 1>}]} {
    %c0 = arith.constant 0 : index
    %c0_0 = arith.constant 0 : index
    %0 = vector.load %arg1[%c0, %c0_0] : memref<8x32xf32, #tpu.memory_space<vmem>>, vector<8x32xf32>
    %cst = arith.constant 2.500000e-01 : f32
    %1 = vector.broadcast %cst : f32 to vector<8x32xf32>
    %2 = arith.mulf %0, %1 : vector<8x32xf32>
    %c0_1 = arith.constant 0 : index
    %c0_2 = arith.constant 0 : index
    %3 = vector.load %arg2[%c0_1, %c0_2] : memref<8x32xf32, #tpu.memory_space<vmem>>, vector<8x32xf32>
    %cst_3 = arith.constant 2.500000e-01 : f32
    %4 = vector.broadcast %cst_3 : f32 to vector<8x32xf32>
    %5 = arith.mulf %3, %4 : vector<8x32xf32>
    %cst_4 = arith.constant dense<0xFF800000> : vector<8xf32>
    %6 = vector.multi_reduction <maximumf>, %2, %cst_4 [1] : vector<8x32xf32> to vector<8xf32>
    %7 = vector.shape_cast %6 : vector<8xf32> to vector<8x1xf32>
    %8 = vector.broadcast %7 : vector<8x1xf32> to vector<8x32xf32>
    %9 = arith.subf %2, %8 : vector<8x32xf32>
    %cst_5 = arith.constant dense<0xFF800000> : vector<8xf32>
    %10 = vector.multi_reduction <maximumf>, %5, %cst_5 [1] : vector<8x32xf32> to vector<8xf32>
    %11 = vector.shape_cast %10 : vector<8xf32> to vector<8x1xf32>
    %12 = vector.broadcast %11 : vector<8x1xf32> to vector<8x32xf32>
    %13 = arith.subf %5, %12 : vector<8x32xf32>
    %14 = math.exp %9 : vector<8x32xf32>
    %cst_6 = arith.constant dense<0.000000e+00> : vector<8xf32>
    %15 = vector.multi_reduction <add>, %14, %cst_6 [1] : vector<8x32xf32> to vector<8xf32>
    %16 = vector.shape_cast %15 : vector<8xf32> to vector<8x1xf32>
    %17 = math.exp %13 : vector<8x32xf32>
    %cst_7 = arith.constant dense<0.000000e+00> : vector<8xf32>
    %18 = vector.multi_reduction <add>, %17, %cst_7 [1] : vector<8x32xf32> to vector<8xf32>
    %19 = vector.shape_cast %18 : vector<8xf32> to vector<8x1xf32>
    %20 = arith.subf %13, %9 : vector<8x32xf32>
    %21 = arith.mulf %17, %20 : vector<8x32xf32>
    %cst_8 = arith.constant dense<0.000000e+00> : vector<8xf32>
    %22 = vector.multi_reduction <add>, %21, %cst_8 [1] : vector<8x32xf32> to vector<8xf32>
    %23 = vector.shape_cast %22 : vector<8xf32> to vector<8x1xf32>
    %24 = arith.divf %23, %19 : vector<8x1xf32>
    %25 = math.log %16 : vector<8x1xf32>
    %26 = arith.addf %24, %25 : vector<8x1xf32>
    %27 = math.log %19 : vector<8x1xf32>
    %28 = arith.subf %26, %27 : vector<8x1xf32>
    %29 = vector.shape_cast %28 : vector<8x1xf32> to vector<1x8x1xf32>
    %cst_9 = arith.constant dense<0.000000e+00> : vector<1xf32>
    %30 = vector.multi_reduction <add>, %29, %cst_9 [1, 2] : vector<1x8x1xf32> to vector<1xf32>
    %31 = vector.shape_cast %30 : vector<1xf32> to vector<1x1x1xf32>
    %32 = vector.extract %31[0, 0, 0] : f32 from vector<1x1x1xf32>
    %c0_10 = arith.constant 0 : index
    %c0_11 = arith.constant 0 : index
    %33 = memref.load %arg3[%c0_10, %c0_11] : memref<1x1xf32, #tpu.memory_space<smem>>
    memref.store %32, %arg3[%c0_10, %c0_11] : memref<1x1xf32, #tpu.memory_space<smem>>
    return
  }
  func.func @transform_0(%arg0: i32) -> (i32, i32) {
    %c0_i32 = arith.constant 0 : i32
    %c0_i32_0 = arith.constant 0 : i32
    return %arg0, %c0_i32 : i32, i32
  }
  func.func @transform_1(%arg0: i32) -> (i32, i32) {
    %c0_i32 = arith.constant 0 : i32
    %c0_i32_0 = arith.constant 0 : i32
    return %arg0, %c0_i32 : i32, i32
  }
  func.func @transform_2(%arg0: i32) -> (i32, i32) {
    %c0_i32 = arith.constant 0 : i32
    %c0_i32_0 = arith.constant 0 : i32
    return %arg0, %c0_i32 : i32, i32
  }
}

</mosaic_0001>

<llo_original>
// kernel: tpu_custom_call.1
$region0: #{tpu_custom_call.1}
  #allocation0 [shape = 'u32[]', space=smem, size = 0x4, offset = 0x4, fixed_abs, tag = 'smem constant byte address 0x4 - core index']
  #allocation1 [shape = 'u32[144,128]{1,0:T(1,128)}', space=vmem, size = 0x12000, scoped, tag = 'internal scratch']
  %s0 = inlined_call_operand.hbm [shape: f32[8,32], index: 0, kind: input, shape index: {}]
  %s1 = inlined_call_operand.hbm [shape: f32[8,32], index: 1, kind: input, shape index: {}]
  %s2 = inlined_call_operand.hbm [shape: f32[1,1], index: 2, kind: output, shape index: {}]
  %s3 = sld [smem:[#allocation0]]
  $region26: #{tpu_custom_call.1} parent=0
    _
  %s5 = ssub.s32 1, %s3
  %s6 = scalar_select 0, %s5, %s3
  $region1: #{tpu_custom_call.1} parent=0
    #allocation2 [shape = 'u8[4096]{0}', space=vmem, size = 0x1000, scoped, tag = 'input window, operand 0, single buffered']
    #allocation3 [shape = 's32[1]{0}', space=sflag, size = 0x4, scoped, tag = 'scoped memory for tpu_custom_call.1']
    #allocation4 [shape = 's32[1]{0}', space=sflag, size = 0x4, scoped, tag = 'scoped memory for tpu_custom_call.1']
    #allocation5 [shape = 'u8[4096]{0}', space=vmem, size = 0x1000, scoped, tag = 'input window, operand 1, single buffered']
    #allocation6 [shape = 's32[1]{0}', space=sflag, size = 0x4, scoped, tag = 'scoped memory for tpu_custom_call.1']
    #allocation7 [shape = 'u8[512]{0}', space=smem, size = 0x200, scoped, tag = 'output window, operand 0, single buffered']
    %7 = vsyncpa [#allocation3], 0
    %8 = vsyncpa [#allocation6], 0
    %9 = vsyncpa [#allocation4], 0
    // Predicated region
    $region2: #{tpu_custom_call.1} parent=1 // pred_check
      _
    $region3: #{tpu_custom_call.1} parent=1 // pred_check_branch
      %11 = sbr.rel (0) target = $region5
    $region4: #{tpu_custom_call.1} parent=1 // pred_region
      %s13 = ssub.s32 128, 128
      %14 = vsyncadd [#allocation3], %s13
      %s16 = sshll.u32 [#allocation2], 4
      %s17 = int_to_ptr.vmem [resolvable:$true] %s16
      %19 = dma.hbm_to_vmem [thread:$0]  %s0, 128, %s17, [#allocation3]
    $region5: #{tpu_custom_call.1} parent=1 // pred_fallthru
      _
    // Predicated region
    $region6: #{tpu_custom_call.1} parent=1 // pred_check
      _
    $region7: #{tpu_custom_call.1} parent=1 // pred_check_branch
      %21 = sbr.rel (0) target = $region9
    $region8: #{tpu_custom_call.1} parent=1 // pred_region
      %s23 = ssub.s32 128, 128
      %24 = vsyncadd [#allocation6], %s23
      %s26 = sshll.u32 [#allocation5], 4
      %s27 = int_to_ptr.vmem [resolvable:$true] %s26
      %29 = dma.hbm_to_vmem [thread:$0]  %s1, 128, %s27, [#allocation6]
    $region9: #{tpu_custom_call.1} parent=1 // pred_fallthru
      _
    // Predicated region
    $region10: #{tpu_custom_call.1} parent=1 // pred_check
      _
    $region11: #{tpu_custom_call.1} parent=1 // pred_check_branch
      %31 = sbr.rel (0) target = $region13
    $region12: #{tpu_custom_call.1} parent=1 // pred_region
      %32 = dma.done [#allocation3], 128
    $region13: #{tpu_custom_call.1} parent=1 // pred_fallthru
      _
    // Predicated region
    $region14: #{tpu_custom_call.1} parent=1 // pred_check
      _
    $region15: #{tpu_custom_call.1} parent=1 // pred_check_branch
      %34 = sbr.rel (0) target = $region17
    $region16: #{tpu_custom_call.1} parent=1 // pred_region
      %35 = dma.done [#allocation6], 128
    $region17: #{tpu_custom_call.1} parent=1 // pred_fallthru
      _
    %v36 = vld [vmem:[#allocation2] sm:$0xff]
    %v37 = vmul.f32 %v36, 0.25
    %v38 = vld [vmem:[#allocation5] sm:$0xff]
    %v39 = vmul.f32 %v38, 0.25
    %vm40 = vcmask 261120
    %v41 = vsel %vm40, %v37, -inf
    %42 = vmax.xlane.f32.xlu0 %v41
    %v43 = vpop.xlane.xlu0 %42
    %v44 = vsub.f32 %v37, %v43
    %v45 = vsel %vm40, %v39, -inf
    %46 = vmax.xlane.f32.xlu0 %v45
    %v47 = vpop.xlane.xlu0 %46
    %v48 = vsub.f32 %v39, %v47
    %v49 = vmul.f32 %v44, 1.442695
    %v50 = vpow.pop %v49
    %v51 = vsel %vm40, %v50, 0.0
    %52 = vadd.xlane.f32.xlu0 %v51
    %v53 = vpop.xlane.xlu0 %52
    %v54 = vmul.f32 %v48, 1.442695
    %v55 = vpow.pop %v54
    %v56 = vsel %vm40, %v55, 0.0
    %57 = vadd.xlane.f32.xlu0 %v56
    %v58 = vpop.xlane.xlu0 %57
    %v59 = vsub.f32 %v48, %v44
    %v60 = vmul.f32 %v55, %v59
    %v61 = vsel %vm40, %v60, 0.0
    %62 = vadd.xlane.f32.xlu0 %v61
    %v63 = vpop.xlane.xlu0 %62
    %v64 = vrcp.pop %v58
    %v65 = vmul.f32 %v63, %v64
    %v66 = vlog2.pop %v53
    %v67 = vmul.f32 %v66, 0.6931472
    %v68 = vadd.f32 %v65, %v67
    %v69 = vlog2.pop %v58
    %v70 = vmul.f32 %v69, 0.6931472
    %v71 = vsub.f32 %v68, %v70
    %vm72 = vcmask 7168
    %v73 = vsel %vm72, %v71, 0.0
    %74 = vadd.xlane.f32.xlu0 %v73
    %v75 = vpop.xlane.xlu0 %74
    %v76 = vrot.slane %v75, 4
    %v77 = vadd.f32 %v75, %v76
    %v78 = vrot.slane %v77, 2
    %v79 = vadd.f32 %v77, %v78
    %v80 = vrot.slane %v79, 1
    %v81 = vadd.f32 %v79, %v80
    %s82 = vtos %v81
    %s83 = scalar_lea.smem [#allocation7], 0
    %84 = sst [smem:[%s83]] %s82
    // Predicated region
    $region18: #{tpu_custom_call.1} parent=1 // pred_check
      _
    $region19: #{tpu_custom_call.1} parent=1 // pred_check_branch
      %86 = sbr.rel (0) target = $region21
    $region20: #{tpu_custom_call.1} parent=1 // pred_region
      %s88 = ssub.s32 16, 16
      %89 = vsyncadd [#allocation4], %s88
      %92 = dma.smem_to_hbm [#allocation7], 16, %s2, [#allocation4]
    $region21: #{tpu_custom_call.1} parent=1 // pred_fallthru
      _
    // Predicated region
    $region22: #{tpu_custom_call.1} parent=1 // pred_check
      _
    $region23: #{tpu_custom_call.1} parent=1 // pred_check_branch
      %94 = sbr.rel (0) target = $region25
    $region24: #{tpu_custom_call.1} parent=1 // pred_region
      %95 = dma.done [#allocation4], 16
    $region25: #{tpu_custom_call.1} parent=1 // pred_fallthru
      _
    %96 = sfence
    %97 = vsyncpa [#allocation3], 1
    %98 = vsyncpa [#allocation6], 1
    %99 = vsyncpa [#allocation4], 1

</llo_original>
